<compile_context>
chip_gen: v5e
topology: v5e:2x2
jax: 0.10.0
libtpu: 0.0.40
codegen_flags: <defaults>
</compile_context>

<pallas_src>
import functools

import jax
import jax.numpy as jnp
from jax.experimental import pallas as pl
from jax.experimental.pallas import tpu as pltpu

INPUT_SIZE = 7
HIDDEN_SIZE = 32
TARGET_WEIGHT = 3.0

IN_AUG = 8     # input features + 1 bias column (full last dim of x / out refs)
H_PAD = 128    # lane-padded hidden width of the fc1 weight slab


# --------------------------------------------------------------------------- #
# Kernel
# --------------------------------------------------------------------------- #
def weights_generator_kernel(x_ref, w1_ref, w2_ref, o_ref):
    # x_ref : (bb, 8)     cols 0..6 = x, col 7 = 1.0 (bias column)
    # w1_ref: (8, 128)    rows 0..6 = fc1.W (in,out), row 7 = fc1.b, [7,32] = 1.0
    # w2_ref: (128, 8)    rows 0..31 = fc2.W (in,out), row 32 = fc2.b
    # o_ref : (bb, 8)     cols 0..6 = sigmoid(fc2(relu(fc1(x)))) * target_weight
    hp = jax.lax.Precision.HIGHEST  # exact-f32 matmuls; MXU slack is huge at K=8/33

    # fc1 + bias (folded via the 1.0 column) + ReLU.  Column 32 of h is exactly
    # ReLU(1.0) = 1.0, which carries the fc2 bias through the second matmul.
    h = jnp.maximum(
        jnp.dot(x_ref[...], w1_ref[...], precision=hp,
                preferred_element_type=jnp.float32),
        0.0)                                                         # (bb, 128)

    # fc2 + bias (folded).
    y = jnp.dot(h, w2_ref[...], precision=hp,
                preferred_element_type=jnp.float32)                  # (bb, 8)

    # sigmoid(y) * target_weight == target / (1 + exp(-y)).
    # NOTE: keep approx=False -- the approximate EUP reciprocal (~2e-4 rel err)
    # would blow the 1e-5 tolerance once scaled by target_weight.
    o_ref[...] = (TARGET_WEIGHT
                  * pl.reciprocal(1.0 + jnp.exp(-y), approx=False)
                  ).astype(o_ref.dtype)


# --------------------------------------------------------------------------- #
# Parameter packing (one-time setup)
# --------------------------------------------------------------------------- #
def pack_params(w1, b1, w2, b2):
    """Pack fc1/fc2 into two bias-augmented slabs.

    w1: (INPUT_SIZE, HIDDEN_SIZE), b1: (HIDDEN_SIZE,)
    w2: (HIDDEN_SIZE, INPUT_SIZE), b2: (INPUT_SIZE,)
    (PyTorch nn.Linear.weight is (out, in); transpose before calling.)
    """
    w1_aug = jnp.zeros((IN_AUG, H_PAD), jnp.float32)
    w1_aug = w1_aug.at[:INPUT_SIZE, :HIDDEN_SIZE].set(jnp.asarray(w1, jnp.float32))
    w1_aug = w1_aug.at[INPUT_SIZE, :HIDDEN_SIZE].set(jnp.asarray(b1, jnp.float32))
    w1_aug = w1_aug.at[INPUT_SIZE, HIDDEN_SIZE].set(1.0)  # unit passthrough column

    w2_aug = jnp.zeros((H_PAD, IN_AUG), jnp.float32)
    w2_aug = w2_aug.at[:HIDDEN_SIZE, :INPUT_SIZE].set(jnp.asarray(w2, jnp.float32))
    w2_aug = w2_aug.at[HIDDEN_SIZE, :INPUT_SIZE].set(jnp.asarray(b2, jnp.float32))
    return w1_aug, w2_aug


# --------------------------------------------------------------------------- #
# Batch tiling
# --------------------------------------------------------------------------- #
def _round_up(n, m):
    return ((n + m - 1) // m) * m


def _cdiv(a, b):
    return (a + b - 1) // b


_MULTI_TC_CACHE = None


def _has_multiple_tensorcores():
    """True on chips whose grid 'parallel' axis spans >1 TensorCore (v4/v5p/v7x)."""
    global _MULTI_TC_CACHE
    if _MULTI_TC_CACHE is None:
        try:
            kind = jax.devices()[0].device_kind.lower()
        except Exception:
            kind = ""
        _MULTI_TC_CACHE = any(tag in kind for tag in ("v4", "v5p", "v7"))
    return _MULTI_TC_CACHE


def _batch_tiling(B, max_block_b):
    """Balanced tiles; padding waste bounded by <8 rows per tile."""
    B8 = _round_up(max(B, 1), 8)
    n_tiles = max(1, _cdiv(B8, max_block_b))
    if B >= 16 and _has_multiple_tensorcores():
        n_tiles = max(n_tiles, 2)          # put both TensorCores to work
    bb = _round_up(_cdiv(B8, n_tiles), 8)
    return bb, n_tiles * bb, n_tiles


# --------------------------------------------------------------------------- #
# Wrapper (jitted so padding / slicing fuse around the custom call)
# --------------------------------------------------------------------------- #
@functools.partial(jax.jit, static_argnames=("max_block_b",))
def weights_generator(x, w1_aug, w2_aug, *, max_block_b=1024):
    """x: (B, INPUT_SIZE) or (INPUT_SIZE,) float.  Matches PyTorch .squeeze(0)."""
    x2 = x.reshape(1, -1) if x.ndim == 1 else x
    B, f = x2.shape
    assert f == INPUT_SIZE, (B, f)

    bb, B_pad, _ = _batch_tiling(B, max_block_b)

    # Bias-augmented, row-padded input (B_pad, 8): cols 0..6 = x, col 7 = 1.0.
    x_aug = jnp.concatenate(
        [x2.astype(jnp.float32), jnp.ones((B, 1), jnp.float32)], axis=1)
    if B_pad > B:
        x_aug = jnp.pad(x_aug, ((0, B_pad - B), (0, 0)))

    out = pl.pallas_call(
        weights_generator_kernel,
        out_shape=jax.ShapeDtypeStruct((B_pad, IN_AUG), jnp.float32),
        grid=(B_pad // bb,),
        in_specs=[
            pl.BlockSpec((bb, IN_AUG), lambda i: (i, 0)),       # x tile (narrow)
            pl.BlockSpec((IN_AUG, H_PAD), lambda i: (0, 0)),    # fc1 slab (resident)
            pl.BlockSpec((H_PAD, IN_AUG), lambda i: (0, 0)),    # fc2 slab (resident)
        ],
        out_specs=pl.BlockSpec((bb, IN_AUG), lambda i: (i, 0)),
        compiler_params=pltpu.CompilerParams(
            dimension_semantics=("parallel",)),  # shards batch tiles over TCs
    )(x_aug, w1_aug, w2_aug)

    out = out[:B, :INPUT_SIZE]
    # PyTorch .squeeze(0): drop the leading dim only if it is 1.
    return out[0] if B == 1 else out


# --------------------------------------------------------------------------- #
# Reference / init / test
# --------------------------------------------------------------------------- #
def _init_linear(key, fan_in, fan_out):
    """Deterministic init mimicking nn.Linear default (uniform +-1/sqrt(fan_in)),
    stored as (in_features, out_features)."""
    kw, kb = jax.random.split(key)
    bound = 1.0 / jnp.sqrt(float(fan_in))
    w = jax.random.uniform(kw, (fan_in, fan_out), jnp.float32, -bound, bound)
    b = jax.random.uniform(kb, (fan_out,), jnp.float32, -bound, bound)
    return w, b


def _reference(x, w1, b1, w2, b2):
    hp = jax.lax.Precision.HIGHEST
    h = jnp.maximum(jnp.dot(x, w1, precision=hp) + b1, 0.0)
    y = jnp.dot(h, w2, precision=hp) + b2
    out = jax.nn.sigmoid(y) * TARGET_WEIGHT
    return out[0] if out.shape[0] == 1 else out


if __name__ == "__main__":
    key = jax.random.PRNGKey(0)
    kx1, kx2, kx3, k1, k2 = jax.random.split(key, 5)

    w1, b1 = _init_linear(k1, INPUT_SIZE, HIDDEN_SIZE)
    w2, b2 = _init_linear(k2, HIDDEN_SIZE, INPUT_SIZE)
    w1_aug, w2_aug = pack_params(w1, b1, w2, b2)

    # Case 1: module-style single sample (batch=1 -> squeeze(0) drops the dim).
    x1 = jax.random.normal(kx1, (1, INPUT_SIZE), jnp.float32)
    out1 = jax.block_until_ready(weights_generator(x1, w1_aug, w2_aug))
    ref1 = _reference(x1, w1, b1, w2, b2)
    assert out1.shape == (INPUT_SIZE,), out1.shape
    assert jnp.allclose(out1, ref1, atol=1e-5, rtol=1e-5), (out1, ref1)

    # Case 2: small batch (exercises the forced 2-tile grid on multi-TC chips).
    x2 = jax.random.normal(kx2, (20, INPUT_SIZE), jnp.float32)
    out2 = jax.block_until_ready(weights_generator(x2, w1_aug, w2_aug))
    ref2 = _reference(x2, w1, b1, w2, b2)
    assert out2.shape == (20, INPUT_SIZE), out2.shape
    assert jnp.allclose(out2, ref2, atol=1e-5, rtol=1e-5), (out2, ref2)

    # Case 3: awkward batch size (tiling math: 300 -> balanced tiles, <8 pad rows/tile).
    x3 = jax.random.normal(kx3, (300, INPUT_SIZE), jnp.float32)
    out3 = jax.block_until_ready(weights_generator(x3, w1_aug, w2_aug))
    ref3 = _reference(x3, w1, b1, w2, b2)
    assert out3.shape == (300, INPUT_SIZE), out3.shape
    assert jnp.allclose(out3, ref3, atol=1e-5, rtol=1e-5), (out3, ref3)

    print("KERNEL_OK")
</pallas_src>

<mosaic_0001>
module attributes {stable_mosaic.version = 11 : i64} {
  func.func @weights_generator_kernel(%arg0: i32, %arg1: memref<8x8xf32, #tpu.memory_space<vmem>>, %arg2: memref<8x128xf32, #tpu.memory_space<vmem>>, %arg3: memref<128x8xf32, #tpu.memory_space<vmem>>, %arg4: memref<8x8xf32, #tpu.memory_space<vmem>>) attributes {dimension_semantics = [#tpu.dimension_semantics<parallel>], iteration_bounds = array<i64: 1>, scalar_prefetch = 0 : i64, scratch_operands = 0 : i64, tpu.core_type = #tpu.core_type<tc>, window_params = [{transform_indices = @transform_0, window_bounds = array<i64: 8, 8>}, {pipeline_mode = #tpu.pipeline_mode<synchronous>, transform_indices = @transform_1, window_bounds = array<i64: 8, 128>}, {pipeline_mode = #tpu.pipeline_mode<synchronous>, transform_indices = @transform_2, window_bounds = array<i64: 128, 8>}, {transform_indices = @transform_3, window_bounds = array<i64: 8, 8>}]} {
    %c0 = arith.constant 0 : index
    %c0_0 = arith.constant 0 : index
    %0 = vector.load %arg1[%c0, %c0_0] : memref<8x8xf32, #tpu.memory_space<vmem>>, vector<8x8xf32>
    %c0_1 = arith.constant 0 : index
    %c0_2 = arith.constant 0 : index
    %1 = vector.load %arg2[%c0_1, %c0_2] : memref<8x128xf32, #tpu.memory_space<vmem>>, vector<8x128xf32>
    %cst = arith.constant dense<0.000000e+00> : vector<8x128xf32>
    %2 = tpu.matmul %0, %1, %cst {dimension_numbers = #tpu.dot_dimension_numbers<[1], [0], [0], [1], [0, 0, 1, 1], [], []>, precision = #tpu.contract_precision<fp32>} : vector<8x8xf32>, vector<8x128xf32>, vector<8x128xf32> -> vector<8x128xf32>
    %cst_3 = arith.constant 0.000000e+00 : f32
    %3 = vector.broadcast %cst_3 : f32 to vector<8x128xf32>
    %4 = arith.maximumf %2, %3 : vector<8x128xf32>
    %c0_4 = arith.constant 0 : index
    %c0_5 = arith.constant 0 : index
    %5 = vector.load %arg3[%c0_4, %c0_5] : memref<128x8xf32, #tpu.memory_space<vmem>>, vector<128x8xf32>
    %cst_6 = arith.constant dense<0.000000e+00> : vector<8x8xf32>
    %6 = tpu.matmul %4, %5, %cst_6 {dimension_numbers = #tpu.dot_dimension_numbers<[1], [0], [0], [1], [0, 0, 1, 1], [], []>, precision = #tpu.contract_precision<fp32>} : vector<8x128xf32>, vector<128x8xf32>, vector<8x8xf32> -> vector<8x8xf32>
    %cst_7 = arith.constant 0.000000e+00 : f32
    %7 = vector.broadcast %cst_7 : f32 to vector<8x8xf32>
    %8 = arith.subf %7, %6 : vector<8x8xf32>
    %9 = math.exp %8 : vector<8x8xf32>
    %cst_8 = arith.constant 1.000000e+00 : f32
    %10 = vector.broadcast %cst_8 : f32 to vector<8x8xf32>
    %11 = arith.addf %10, %9 : vector<8x8xf32>
    %12 = tpu.reciprocal %11 : vector<8x8xf32> -> vector<8x8xf32>
    %cst_9 = arith.constant 3.000000e+00 : f32
    %13 = vector.broadcast %cst_9 : f32 to vector<8x8xf32>
    %14 = arith.mulf %13, %12 : vector<8x8xf32>
    %c0_10 = arith.constant 0 : index
    %c0_11 = arith.constant 0 : index
    %15 = vector.load %arg4[%c0_10, %c0_11] : memref<8x8xf32, #tpu.memory_space<vmem>>, vector<8x8xf32>
    tpu.vector_store %arg4[%c0_10, %c0_11], %14 {strides = array<i32>} : memref<8x8xf32, #tpu.memory_space<vmem>>, vector<8x8xf32>,
    return
  }
  func.func @transform_0(%arg0: i32) -> (i32, i32) {
    %c0_i32 = arith.constant 0 : i32
    %c0_i32_0 = arith.constant 0 : i32
    return %arg0, %c0_i32 : i32, i32
  }
  func.func @transform_1(%arg0: i32) -> (i32, i32) {
    %c0_i32 = arith.constant 0 : i32
    %c0_i32_0 = arith.constant 0 : i32
    %c0_i32_1 = arith.constant 0 : i32
    return %c0_i32, %c0_i32_0 : i32, i32
  }
  func.func @transform_2(%arg0: i32) -> (i32, i32) {
    %c0_i32 = arith.constant 0 : i32
    %c0_i32_0 = arith.constant 0 : i32
    %c0_i32_1 = arith.constant 0 : i32
    return %c0_i32, %c0_i32_0 : i32, i32
  }
  func.func @transform_3(%arg0: i32) -> (i32, i32) {
    %c0_i32 = arith.constant 0 : i32
    %c0_i32_0 = arith.constant 0 : i32
    return %arg0, %c0_i32 : i32, i32
  }
}

</mosaic_0001>

<llo_original>
// kernel: weights_generator.1
$region0: #{weights_generator.1}
  #allocation0 [shape = 'u32[]', space=smem, size = 0x4, offset = 0x4, fixed_abs, tag = 'smem constant byte address 0x4 - core index']
  #allocation1 [shape = 'u32[72,128]{1,0:T(1,128)}', space=vmem, size = 0x9000, scoped, tag = 'internal scratch']
  %s0 = inlined_call_operand.vmem [shape: f32[8,8], index: 0, kind: input, shape index: {}]
  %s1 = inlined_call_operand.vmem [shape: f32[8,128], index: 1, kind: input, shape index: {}]
  %s2 = inlined_call_operand.vmem [shape: f32[128,8], index: 2, kind: input, shape index: {}]
  %s3 = inlined_call_operand.vmem [shape: f32[8,8], index: 3, kind: output, shape index: {}]
  %s4 = sld [smem:[#allocation0]]
  $region22: #{weights_generator.1} parent=0
    _
  %s6 = ssub.s32 1, %s4
  %s7 = scalar_select 0, %s6, %s4
  // Predicated region
  $region2: #{weights_generator.1} parent=0 // pred_check
    _
  $region3: #{weights_generator.1} parent=0 // pred_check_branch
    %9 = sbr.rel (0) target = $region5
  $region4: #{weights_generator.1} parent=0 // pred_region
    _
  $region5: #{weights_generator.1} parent=0 // pred_fallthru
    _
  // Predicated region
  $region6: #{weights_generator.1} parent=0 // pred_check
    _
  $region7: #{weights_generator.1} parent=0 // pred_check_branch
    %11 = sbr.rel (0) target = $region9
  $region8: #{weights_generator.1} parent=0 // pred_region
    _
  $region9: #{weights_generator.1} parent=0 // pred_fallthru
    _
  // Predicated region
  $region10: #{weights_generator.1} parent=0 // pred_check
    _
  $region11: #{weights_generator.1} parent=0 // pred_check_branch
    %13 = sbr.rel (0) target = $region13
  $region12: #{weights_generator.1} parent=0 // pred_region
    _
  $region13: #{weights_generator.1} parent=0 // pred_fallthru
    _
  %v14 = vld [vmem:[%s0] sm:$0xff]
  %v15 = vld [vmem:[%s1] sm:$0xff]
  %vm16 = vcmask 64512
  %v18 = vsel %vm16, %v14, 0
  %20 = vmatpush.msra.mxu0 0.0
  %21 = vmatpush.msra.mxu0 0.0
  %22 = vmatpush.msra.mxu0 0.0
  %23 = vmatpush.msra.mxu0 0.0
  %24 = vmatpush.msra.mxu0 0.0
  %25 = vmatpush.msra.mxu0 0.0
  %26 = vmatpush.msra.mxu0 0.0
  %27 = vmatpush.msra.mxu0 0.0
  %28 = vmatpush.msra.mxu0 0.0
  %29 = vmatpush.msra.mxu0 0.0
  %30 = vmatpush.msra.mxu0 0.0
  %31 = vmatpush.msra.mxu0 0.0
  %32 = vmatpush.msra.mxu0 0.0
  %33 = vmatpush.msra.mxu0 0.0
  %34 = vmatpush.msra.mxu0 0.0
  %v35 = vand.u32 %v15, 4294901760
  %36 = vmatpush.msra.mxu0 %v35
  %v37 = vand.u32 %v18, 4294901760
  %v38 = vsub.f32 %v18, %v37
  %v39 = vand.u32 %v38, 4294901760
  %v40 = vsub.f32 %v38, %v39
  %v41 = vand.u32 %v40, 4294901760
  %42 = vmatmul.f32.gmra.mxu0 %v41
  %v43 = vpop.f32.mrf.mxu0
  %v44 = vadd.f32 0.0, %v43
  %45 = vdwg.mxu0
  %46 = vmatpush.msra.mxu0 0.0
  %47 = vmatpush.msra.mxu0 0.0
  %48 = vmatpush.msra.mxu0 0.0
  %49 = vmatpush.msra.mxu0 0.0
  %50 = vmatpush.msra.mxu0 0.0
  %51 = vmatpush.msra.mxu0 0.0
  %52 = vmatpush.msra.mxu0 0.0
  %53 = vmatpush.msra.mxu0 0.0
  %54 = vmatpush.msra.mxu0 0.0
  %55 = vmatpush.msra.mxu0 0.0
  %56 = vmatpush.msra.mxu0 0.0
  %57 = vmatpush.msra.mxu0 0.0
  %58 = vmatpush.msra.mxu0 0.0
  %59 = vmatpush.msra.mxu0 0.0
  %60 = vmatpush.msra.mxu0 0.0
  %v61 = vand.u32 %v15, 4294901760
  %v62 = vsub.f32 %v15, %v61
  %v63 = vand.u32 %v62, 4294901760
  %v64 = vsub.f32 %v62, %v63
  %v65 = vand.u32 %v64, 4294901760
  %66 = vmatpush.msra.mxu0 %v65
  %v67 = vand.u32 %v18, 4294901760
  %68 = vmatmul.f32.gmra.mxu0 %v67
  %v69 = vpop.f32.mrf.mxu0
  %v70 = vadd.f32 %v44, %v69
  %71 = vdwg.mxu0
  %72 = vmatpush.msra.mxu0 0.0
  %73 = vmatpush.msra.mxu0 0.0
  %74 = vmatpush.msra.mxu0 0.0
  %75 = vmatpush.msra.mxu0 0.0
  %76 = vmatpush.msra.mxu0 0.0
  %77 = vmatpush.msra.mxu0 0.0
  %78 = vmatpush.msra.mxu0 0.0
  %79 = vmatpush.msra.mxu0 0.0
  %80 = vmatpush.msra.mxu0 0.0
  %81 = vmatpush.msra.mxu0 0.0
  %82 = vmatpush.msra.mxu0 0.0
  %83 = vmatpush.msra.mxu0 0.0
  %84 = vmatpush.msra.mxu0 0.0
  %85 = vmatpush.msra.mxu0 0.0
  %86 = vmatpush.msra.mxu0 0.0
  %v87 = vand.u32 %v15, 4294901760
  %v88 = vsub.f32 %v15, %v87
  %89 = vmatpush.msra.mxu0 %v88
  %v90 = vand.u32 %v18, 4294901760
  %v91 = vsub.f32 %v18, %v90
  %92 = vmatmul.f32.gmra.mxu0 %v91
  %v93 = vpop.f32.mrf.mxu0
  %v94 = vadd.f32 %v70, %v93
  %95 = vdwg.mxu0
  %96 = vmatpush.msra.mxu0 0.0
  %97 = vmatpush.msra.mxu0 0.0
  %98 = vmatpush.msra.mxu0 0.0
  %99 = vmatpush.msra.mxu0 0.0
  %100 = vmatpush.msra.mxu0 0.0
  %101 = vmatpush.msra.mxu0 0.0
  %102 = vmatpush.msra.mxu0 0.0
  %103 = vmatpush.msra.mxu0 0.0
  %104 = vmatpush.msra.mxu0 0.0
  %105 = vmatpush.msra.mxu0 0.0
  %106 = vmatpush.msra.mxu0 0.0
  %107 = vmatpush.msra.mxu0 0.0
  %108 = vmatpush.msra.mxu0 0.0
  %109 = vmatpush.msra.mxu0 0.0
  %110 = vmatpush.msra.mxu0 0.0
  %v111 = vand.u32 %v15, 4294901760
  %112 = vmatpush.msra.mxu0 %v111
  %v113 = vand.u32 %v18, 4294901760
  %v114 = vsub.f32 %v18, %v113
  %v115 = vand.u32 %v114, 4294901760
  %116 = vmatmul.f32.gmra.mxu0 %v115
  %v117 = vpop.f32.mrf.mxu0
  %v118 = vadd.f32 %v94, %v117
  %119 = vdwg.mxu0
  %120 = vmatpush.msra.mxu0 0.0
  %121 = vmatpush.msra.mxu0 0.0
  %122 = vmatpush.msra.mxu0 0.0
  %123 = vmatpush.msra.mxu0 0.0
  %124 = vmatpush.msra.mxu0 0.0
  %125 = vmatpush.msra.mxu0 0.0
  %126 = vmatpush.msra.mxu0 0.0
  %127 = vmatpush.msra.mxu0 0.0
  %128 = vmatpush.msra.mxu0 0.0
  %129 = vmatpush.msra.mxu0 0.0
  %130 = vmatpush.msra.mxu0 0.0
  %131 = vmatpush.msra.mxu0 0.0
  %132 = vmatpush.msra.mxu0 0.0
  %133 = vmatpush.msra.mxu0 0.0
  %134 = vmatpush.msra.mxu0 0.0
  %v135 = vand.u32 %v15, 4294901760
  %v136 = vsub.f32 %v15, %v135
  %v137 = vand.u32 %v136, 4294901760
  %138 = vmatpush.msra.mxu0 %v137
  %v139 = vand.u32 %v18, 4294901760
  %140 = vmatmul.f32.gmra.mxu0 %v139
  %v141 = vpop.f32.mrf.mxu0
  %v142 = vadd.f32 %v118, %v141
  %143 = vdwg.mxu0
  %144 = vmatpush.msra.mxu0 0.0
  %145 = vmatpush.msra.mxu0 0.0
  %146 = vmatpush.msra.mxu0 0.0
  %147 = vmatpush.msra.mxu0 0.0
  %148 = vmatpush.msra.mxu0 0.0
  %149 = vmatpush.msra.mxu0 0.0
  %150 = vmatpush.msra.mxu0 0.0
  %151 = vmatpush.msra.mxu0 0.0
  %152 = vmatpush.msra.mxu0 0.0
  %153 = vmatpush.msra.mxu0 0.0
  %154 = vmatpush.msra.mxu0 0.0
  %155 = vmatpush.msra.mxu0 0.0
  %156 = vmatpush.msra.mxu0 0.0
  %157 = vmatpush.msra.mxu0 0.0
  %158 = vmatpush.msra.mxu0 0.0
  %v159 = vand.u32 %v15, 4294901760
  %160 = vmatpush.msra.mxu0 %v159
  %v161 = vand.u32 %v18, 4294901760
  %162 = vmatmul.f32.gmra.mxu0 %v161
  %v163 = vpop.f32.mrf.mxu0
  %v164 = vadd.f32 %v142, %v163
  %165 = vdwg.mxu0
  %v166 = vmax.f32 %v164, 0.0
  %v167 = vld [vmem:[%s2] sm:$0xff]
  %v168 = vld [vmem:[%s2 + $0x8] sm:$0xff]
  %v169 = vld [vmem:[%s2 + $0x10] sm:$0xff]
  %v170 = vld [vmem:[%s2 + $0x18] sm:$0xff]
  %v171 = vld [vmem:[%s2 + $0x20] sm:$0xff]
  %v172 = vld [vmem:[%s2 + $0x28] sm:$0xff]
  %v173 = vld [vmem:[%s2 + $0x30] sm:$0xff]
  %v174 = vld [vmem:[%s2 + $0x38] sm:$0xff]
  %v175 = vld [vmem:[%s2 + $0x40] sm:$0xff]
  %v176 = vld [vmem:[%s2 + $0x48] sm:$0xff]
  %v177 = vld [vmem:[%s2 + $0x50] sm:$0xff]
  %v178 = vld [vmem:[%s2 + $0x58] sm:$0xff]
  %v179 = vld [vmem:[%s2 + $0x60] sm:$0xff]
  %v180 = vld [vmem:[%s2 + $0x68] sm:$0xff]
  %v181 = vld [vmem:[%s2 + $0x70] sm:$0xff]
  %v182 = vld [vmem:[%s2 + $0x78] sm:$0xff]
  %v183 = vand.u32 %v182, 4294901760
  %184 = vmatpush.msra.mxu0 %v183
  %v185 = vand.u32 %v181, 4294901760
  %186 = vmatpush.msra.mxu0 %v185
  %v187 = vand.u32 %v180, 4294901760
  %188 = vmatpush.msra.mxu0 %v187
  %v189 = vand.u32 %v179, 4294901760
  %190 = vmatpush.msra.mxu0 %v189
  %v191 = vand.u32 %v178, 4294901760
  %192 = vmatpush.msra.mxu0 %v191
  %v193 = vand.u32 %v177, 4294901760
  %194 = vmatpush.msra.mxu0 %v193
  %v195 = vand.u32 %v176, 4294901760
  %196 = vmatpush.msra.mxu0 %v195
  %v197 = vand.u32 %v175, 4294901760
  %198 = vmatpush.msra.mxu0 %v197
  %v199 = vand.u32 %v174, 4294901760
  %200 = vmatpush.msra.mxu0 %v199
  %v201 = vand.u32 %v173, 4294901760
  %202 = vmatpush.msra.mxu0 %v201
  %v203 = vand.u32 %v172, 4294901760
  %204 = vmatpush.msra.mxu0 %v203
  %v205 = vand.u32 %v171, 4294901760
  %206 = vmatpush.msra.mxu0 %v205
  %v207 = vand.u32 %v170, 4294901760
  %208 = vmatpush.msra.mxu0 %v207
  %v209 = vand.u32 %v169, 4294901760
  %210 = vmatpush.msra.mxu0 %v209
  %v211 = vand.u32 %v168, 4294901760
  %212 = vmatpush.msra.mxu0 %v211
  %v213 = vand.u32 %v167, 4294901760
  %214 = vmatpush.msra.mxu0 %v213
  %v215 = vand.u32 %v166, 4294901760
  %v216 = vsub.f32 %v166, %v215
  %v217 = vand.u32 %v216, 4294901760
  %v218 = vsub.f32 %v216, %v217
  %v219 = vand.u32 %v218, 4294901760
  %220 = vmatmul.f32.gmra.mxu0 %v219
  %v221 = vpop.f32.mrf.mxu0
  %v222 = vadd.f32 0.0, %v221
  %223 = vdwg.mxu0
  %v224 = vand.u32 %v182, 4294901760
  %v225 = vsub.f32 %v182, %v224
  %v226 = vand.u32 %v225, 4294901760
  %v227 = vsub.f32 %v225, %v226
  %v228 = vand.u32 %v227, 4294901760
  %229 = vmatpush.msra.mxu0 %v228
  %v230 = vand.u32 %v181, 4294901760
  %v231 = vsub.f32 %v181, %v230
  %v232 = vand.u32 %v231, 4294901760
  %v233 = vsub.f32 %v231, %v232
  %v234 = vand.u32 %v233, 4294901760
  %235 = vmatpush.msra.mxu0 %v234
  %v236 = vand.u32 %v180, 4294901760
  %v237 = vsub.f32 %v180, %v236
  %v238 = vand.u32 %v237, 4294901760
  %v239 = vsub.f32 %v237, %v238
  %v240 = vand.u32 %v239, 4294901760
  %241 = vmatpush.msra.mxu0 %v240
  %v242 = vand.u32 %v179, 4294901760
  %v243 = vsub.f32 %v179, %v242
  %v244 = vand.u32 %v243, 4294901760
  %v245 = vsub.f32 %v243, %v244
  %v246 = vand.u32 %v245, 4294901760
  %247 = vmatpush.msra.mxu0 %v246
  %v248 = vand.u32 %v178, 4294901760
  %v249 = vsub.f32 %v178, %v248
  %v250 = vand.u32 %v249, 4294901760
  %v251 = vsub.f32 %v249, %v250
  %v252 = vand.u32 %v251, 4294901760
  %253 = vmatpush.msra.mxu0 %v252
  %v254 = vand.u32 %v177, 4294901760
  %v255 = vsub.f32 %v177, %v254
  %v256 = vand.u32 %v255, 4294901760
  %v257 = vsub.f32 %v255, %v256
  %v258 = vand.u32 %v257, 4294901760
  %259 = vmatpush.msra.mxu0 %v258
  %v260 = vand.u32 %v176, 4294901760
  %v261 = vsub.f32 %v176, %v260
  %v262 = vand.u32 %v261, 4294901760
  %v263 = vsub.f32 %v261, %v262
  %v264 = vand.u32 %v263, 4294901760
  %265 = vmatpush.msra.mxu0 %v264
  %v266 = vand.u32 %v175, 4294901760
  %v267 = vsub.f32 %v175, %v266
  %v268 = vand.u32 %v267, 4294901760
  %v269 = vsub.f32 %v267, %v268
  %v270 = vand.u32 %v269, 4294901760
  %271 = vmatpush.msra.mxu0 %v270
  %v272 = vand.u32 %v174, 4294901760
  %v273 = vsub.f32 %v174, %v272
  %v274 = vand.u32 %v273, 4294901760
  %v275 = vsub.f32 %v273, %v274
  %v276 = vand.u32 %v275, 4294901760
  %277 = vmatpush.msra.mxu0 %v276
  %v278 = vand.u32 %v173, 4294901760
  %v279 = vsub.f32 %v173, %v278
  %v280 = vand.u32 %v279, 4294901760
  %v281 = vsub.f32 %v279, %v280
  %v282 = vand.u32 %v281, 4294901760
  %283 = vmatpush.msra.mxu0 %v282
  %v284 = vand.u32 %v172, 4294901760
  %v285 = vsub.f32 %v172, %v284
  %v286 = vand.u32 %v285, 4294901760
  %v287 = vsub.f32 %v285, %v286
  %v288 = vand.u32 %v287, 4294901760
  %289 = vmatpush.msra.mxu0 %v288
  %v290 = vand.u32 %v171, 4294901760
  %v291 = vsub.f32 %v171, %v290
  %v292 = vand.u32 %v291, 4294901760
  %v293 = vsub.f32 %v291, %v292
  %v294 = vand.u32 %v293, 4294901760
  %295 = vmatpush.msra.mxu0 %v294
  %v296 = vand.u32 %v170, 4294901760
  %v297 = vsub.f32 %v170, %v296
  %v298 = vand.u32 %v297, 4294901760
  %v299 = vsub.f32 %v297, %v298
  %v300 = vand.u32 %v299, 4294901760
  %301 = vmatpush.msra.mxu0 %v300
  %v302 = vand.u32 %v169, 4294901760
  %v303 = vsub.f32 %v169, %v302
  %v304 = vand.u32 %v303, 4294901760
  %v305 = vsub.f32 %v303, %v304
  %v306 = vand.u32 %v305, 4294901760
  %307 = vmatpush.msra.mxu0 %v306
  %v308 = vand.u32 %v168, 4294901760
  %v309 = vsub.f32 %v168, %v308
  %v310 = vand.u32 %v309, 4294901760
  %v311 = vsub.f32 %v309, %v310
  %v312 = vand.u32 %v311, 4294901760
  %313 = vmatpush.msra.mxu0 %v312
  %v314 = vand.u32 %v167, 4294901760
  %v315 = vsub.f32 %v167, %v314
  %v316 = vand.u32 %v315, 4294901760
  %v317 = vsub.f32 %v315, %v316
  %v318 = vand.u32 %v317, 4294901760
  %319 = vmatpush.msra.mxu0 %v318
  %v320 = vand.u32 %v166, 4294901760
  %321 = vmatmul.f32.gmra.mxu0 %v320
  %v322 = vpop.f32.mrf.mxu0
  %v323 = vadd.f32 %v222, %v322
  %324 = vdwg.mxu0
  %v325 = vand.u32 %v182, 4294901760
  %v326 = vsub.f32 %v182, %v325
  %327 = vmatpush.msra.mxu0 %v326
  %v328 = vand.u32 %v181, 4294901760
  %v329 = vsub.f32 %v181, %v328
  %330 = vmatpush.msra.mxu0 %v329
  %v331 = vand.u32 %v180, 4294901760
  %v332 = vsub.f32 %v180, %v331
  %333 = vmatpush.msra.mxu0 %v332
  %v334 = vand.u32 %v179, 4294901760
  %v335 = vsub.f32 %v179, %v334
  %336 = vmatpush.msra.mxu0 %v335
  %v337 = vand.u32 %v178, 4294901760
  %v338 = vsub.f32 %v178, %v337
  %339 = vmatpush.msra.mxu0 %v338
  %v340 = vand.u32 %v177, 4294901760
  %v341 = vsub.f32 %v177, %v340
  %342 = vmatpush.msra.mxu0 %v341
  %v343 = vand.u32 %v176, 4294901760
  %v344 = vsub.f32 %v176, %v343
  %345 = vmatpush.msra.mxu0 %v344
  %v346 = vand.u32 %v175, 4294901760
  %v347 = vsub.f32 %v175, %v346
  %348 = vmatpush.msra.mxu0 %v347
  %v349 = vand.u32 %v174, 4294901760
  %v350 = vsub.f32 %v174, %v349
  %351 = vmatpush.msra.mxu0 %v350
  %v352 = vand.u32 %v173, 4294901760
  %v353 = vsub.f32 %v173, %v352
  %354 = vmatpush.msra.mxu0 %v353
  %v355 = vand.u32 %v172, 4294901760
  %v356 = vsub.f32 %v172, %v355
  %357 = vmatpush.msra.mxu0 %v356
  %v358 = vand.u32 %v171, 4294901760
  %v359 = vsub.f32 %v171, %v358
  %360 = vmatpush.msra.mxu0 %v359
  %v361 = vand.u32 %v170, 4294901760
  %v362 = vsub.f32 %v170, %v361
  %363 = vmatpush.msra.mxu0 %v362
  %v364 = vand.u32 %v169, 4294901760
  %v365 = vsub.f32 %v169, %v364
  %366 = vmatpush.msra.mxu0 %v365
  %v367 = vand.u32 %v168, 4294901760
  %v368 = vsub.f32 %v168, %v367
  %369 = vmatpush.msra.mxu0 %v368
  %v370 = vand.u32 %v167, 4294901760
  %v371 = vsub.f32 %v167, %v370
  %372 = vmatpush.msra.mxu0 %v371
  %v373 = vand.u32 %v166, 4294901760
  %v374 = vsub.f32 %v166, %v373
  %375 = vmatmul.f32.gmra.mxu0 %v374
  %v376 = vpop.f32.mrf.mxu0
  %v377 = vadd.f32 %v323, %v376
  %378 = vdwg.mxu0
  %v379 = vand.u32 %v182, 4294901760
  %380 = vmatpush.msra.mxu0 %v379
  %v381 = vand.u32 %v181, 4294901760
  %382 = vmatpush.msra.mxu0 %v381
  %v383 = vand.u32 %v180, 4294901760
  %384 = vmatpush.msra.mxu0 %v383
  %v385 = vand.u32 %v179, 4294901760
  %386 = vmatpush.msra.mxu0 %v385
  %v387 = vand.u32 %v178, 4294901760
  %388 = vmatpush.msra.mxu0 %v387
  %v389 = vand.u32 %v177, 4294901760
  %390 = vmatpush.msra.mxu0 %v389
  %v391 = vand.u32 %v176, 4294901760
  %392 = vmatpush.msra.mxu0 %v391
  %v393 = vand.u32 %v175, 4294901760
  %394 = vmatpush.msra.mxu0 %v393
  %v395 = vand.u32 %v174, 4294901760
  %396 = vmatpush.msra.mxu0 %v395
  %v397 = vand.u32 %v173, 4294901760
  %398 = vmatpush.msra.mxu0 %v397
  %v399 = vand.u32 %v172, 4294901760
  %400 = vmatpush.msra.mxu0 %v399
  %v401 = vand.u32 %v171, 4294901760
  %402 = vmatpush.msra.mxu0 %v401
  %v403 = vand.u32 %v170, 4294901760
  %404 = vmatpush.msra.mxu0 %v403
  %v405 = vand.u32 %v169, 4294901760
  %406 = vmatpush.msra.mxu0 %v405
  %v407 = vand.u32 %v168, 4294901760
  %408 = vmatpush.msra.mxu0 %v407
  %v409 = vand.u32 %v167, 4294901760
  %410 = vmatpush.msra.mxu0 %v409
  %v411 = vand.u32 %v166, 4294901760
  %v412 = vsub.f32 %v166, %v411
  %v413 = vand.u32 %v412, 4294901760
  %414 = vmatmul.f32.gmra.mxu0 %v413
  %v415 = vpop.f32.mrf.mxu0
  %v416 = vadd.f32 %v377, %v415
  %417 = vdwg.mxu0
  %v418 = vand.u32 %v182, 4294901760
  %v419 = vsub.f32 %v182, %v418
  %v420 = vand.u32 %v419, 4294901760
  %421 = vmatpush.msra.mxu0 %v420
  %v422 = vand.u32 %v181, 4294901760
  %v423 = vsub.f32 %v181, %v422
  %v424 = vand.u32 %v423, 4294901760
  %425 = vmatpush.msra.mxu0 %v424
  %v426 = vand.u32 %v180, 4294901760
  %v427 = vsub.f32 %v180, %v426
  %v428 = vand.u32 %v427, 4294901760
  %429 = vmatpush.msra.mxu0 %v428
  %v430 = vand.u32 %v179, 4294901760
  %v431 = vsub.f32 %v179, %v430
  %v432 = vand.u32 %v431, 4294901760
  %433 = vmatpush.msra.mxu0 %v432
  %v434 = vand.u32 %v178, 4294901760
  %v435 = vsub.f32 %v178, %v434
  %v436 = vand.u32 %v435, 4294901760
  %437 = vmatpush.msra.mxu0 %v436
  %v438 = vand.u32 %v177, 4294901760
  %v439 = vsub.f32 %v177, %v438
  %v440 = vand.u32 %v439, 4294901760
  %441 = vmatpush.msra.mxu0 %v440
  %v442 = vand.u32 %v176, 4294901760
  %v443 = vsub.f32 %v176, %v442
  %v444 = vand.u32 %v443, 4294901760
  %445 = vmatpush.msra.mxu0 %v444
  %v446 = vand.u32 %v175, 4294901760
  %v447 = vsub.f32 %v175, %v446
  %v448 = vand.u32 %v447, 4294901760
  %449 = vmatpush.msra.mxu0 %v448
  %v450 = vand.u32 %v174, 4294901760
  %v451 = vsub.f32 %v174, %v450
  %v452 = vand.u32 %v451, 4294901760
  %453 = vmatpush.msra.mxu0 %v452
  %v454 = vand.u32 %v173, 4294901760
  %v455 = vsub.f32 %v173, %v454
  %v456 = vand.u32 %v455, 4294901760
  %457 = vmatpush.msra.mxu0 %v456
  %v458 = vand.u32 %v172, 4294901760
  %v459 = vsub.f32 %v172, %v458
  %v460 = vand.u32 %v459, 4294901760
  %461 = vmatpush.msra.mxu0 %v460
  %v462 = vand.u32 %v171, 4294901760
  %v463 = vsub.f32 %v171, %v462
  %v464 = vand.u32 %v463, 4294901760
  %465 = vmatpush.msra.mxu0 %v464
  %v466 = vand.u32 %v170, 4294901760
  %v467 = vsub.f32 %v170, %v466
  %v468 = vand.u32 %v467, 4294901760
  %469 = vmatpush.msra.mxu0 %v468
  %v470 = vand.u32 %v169, 4294901760
  %v471 = vsub.f32 %v169, %v470
  %v472 = vand.u32 %v471, 4294901760
  %473 = vmatpush.msra.mxu0 %v472
  %v474 = vand.u32 %v168, 4294901760
  %v475 = vsub.f32 %v168, %v474
  %v476 = vand.u32 %v475, 4294901760
  %477 = vmatpush.msra.mxu0 %v476
  %v478 = vand.u32 %v167, 4294901760
  %v479 = vsub.f32 %v167, %v478
  %v480 = vand.u32 %v479, 4294901760
  %481 = vmatpush.msra.mxu0 %v480
  %v482 = vand.u32 %v166, 4294901760
  %483 = vmatmul.f32.gmra.mxu0 %v482
  %v484 = vpop.f32.mrf.mxu0
  %v485 = vadd.f32 %v416, %v484
  %486 = vdwg.mxu0
  %v487 = vand.u32 %v182, 4294901760
  %488 = vmatpush.msra.mxu0 %v487
  %v489 = vand.u32 %v181, 4294901760
  %490 = vmatpush.msra.mxu0 %v489
  %v491 = vand.u32 %v180, 4294901760
  %492 = vmatpush.msra.mxu0 %v491
  %v493 = vand.u32 %v179, 4294901760
  %494 = vmatpush.msra.mxu0 %v493
  %v495 = vand.u32 %v178, 4294901760
  %496 = vmatpush.msra.mxu0 %v495
  %v497 = vand.u32 %v177, 4294901760
  %498 = vmatpush.msra.mxu0 %v497
  %v499 = vand.u32 %v176, 4294901760
  %500 = vmatpush.msra.mxu0 %v499
  %v501 = vand.u32 %v175, 4294901760
  %502 = vmatpush.msra.mxu0 %v501
  %v503 = vand.u32 %v174, 4294901760
  %504 = vmatpush.msra.mxu0 %v503
  %v505 = vand.u32 %v173, 4294901760
  %506 = vmatpush.msra.mxu0 %v505
  %v507 = vand.u32 %v172, 4294901760
  %508 = vmatpush.msra.mxu0 %v507
  %v509 = vand.u32 %v171, 4294901760
  %510 = vmatpush.msra.mxu0 %v509
  %v511 = vand.u32 %v170, 4294901760
  %512 = vmatpush.msra.mxu0 %v511
  %v513 = vand.u32 %v169, 4294901760
  %514 = vmatpush.msra.mxu0 %v513
  %v515 = vand.u32 %v168, 4294901760
  %516 = vmatpush.msra.mxu0 %v515
  %v517 = vand.u32 %v167, 4294901760
  %518 = vmatpush.msra.mxu0 %v517
  %v519 = vand.u32 %v166, 4294901760
  %520 = vmatmul.f32.gmra.mxu0 %v519
  %v521 = vpop.f32.mrf.mxu0
  %v522 = vadd.f32 %v485, %v521
  %523 = vdwg.mxu0
  %v524 = vsub.f32 0.0, %v522
  %v525 = vmul.f32 %v524, 1.442695
  %v526 = vpow.pop %v525
  %v527 = vadd.f32 %v526, 1.0
  %v528 = vrcp.pop %v527
  %v529 = vmul.f32 %v527, %v528
  %v530 = vsub.f32 1.0, %v529
  %v531 = vmul.f32 %v528, %v530
  %v532 = vadd.f32 %v528, %v531
  %vm533 = vweird.f32 %v527
  %vm534 = vweird.f32 %v528
  %vm535 = vmor %vm533, %vm534
  %v536 = vsel %vm535, %v528, %v532
  %v537 = vand.u32 2147483647, %v527
  %vm538 = vcmp.eq.f32.partialorder %v537, 8.507059e+37
  %v539 = vand.u32 %v527, 2147483648
  %v540 = vor.u32 1.1754944e-38, %v539
  %v541 = vsel %vm538, %v540, %v536
  %v542 = vmul.f32 %v541, 3.0
  %543 = vst.msk [vmem:[%s3] sm:$0xff] %vm16, %v542
  // Predicated region
  $region14: #{weights_generator.1} parent=0 // pred_check
    _
  $region15: #{weights_generator.1} parent=0 // pred_check_branch
    %545 = sbr.rel (0) target = $region17
  $region16: #{weights_generator.1} parent=0 // pred_region
    _
  $region17: #{weights_generator.1} parent=0 // pred_fallthru
    _
  // Predicated region
  $region18: #{weights_generator.1} parent=0 // pred_check
    _
  $region19: #{weights_generator.1} parent=0 // pred_check_branch
    %547 = sbr.rel (0) target = $region21
  $region20: #{weights_generator.1} parent=0 // pred_region
    _
  $region21: #{weights_generator.1} parent=0 // pred_fallthru
    _

</llo_original>
